<compile_context>
chip_gen: v7x
topology: tpu7x:2x2x1
jax: 0.10.0
libtpu: 0.0.40
codegen_flags: <defaults>
</compile_context>

<pallas_src>
import functools

import jax
import jax.numpy as jnp
from jax.experimental import pallas as pl
from jax.experimental.pallas import tpu as pltpu

_SQRT_HALF = 0.7071067811865476
_MIB = 1024 * 1024


def _round_up(x, m):
    return ((x + m - 1) // m) * m


def _gelu_exact(x):
    # nn.GELU() default is the exact (erf-based) GELU; computed in f32
    # post-accumulation for PyTorch parity.
    return 0.5 * x * (1.0 + jax.lax.erf(x * _SQRT_HALF))


@functools.lru_cache(maxsize=1)
def _tpu_defaults():
    """Per-generation (tile_rows, tile_ff, vmem_limit_bytes, min_row_tiles)."""
    kind = ""
    try:
        kind = jax.devices()[0].device_kind.lower()
    except Exception:  # pragma: no cover - defensive
        pass
    phys = None
    try:
        phys = int(pltpu.get_tpu_info().vmem_capacity_bytes)
    except Exception:  # pragma: no cover - defensive
        pass

    if "v7" in kind:
        # v7x: 64 MiB VMEM/TC (leave ~10 MiB headroom for compiler scratch),
        # 2 TCs/chip, roofline crossover ~310 FLOPs/byte -> tm ~384-512.
        phys = phys or 64 * _MIB
        return dict(tile_rows=512, tile_ff=512,
                    vmem_limit_bytes=max(32 * _MIB, min(phys, 64 * _MIB) - 10 * _MIB),
                    min_row_tiles=2)
    if "v6" in kind:
        # v6e: 128 MiB VMEM, crossover ~650 FLOPs/byte -> large row tiles.
        phys = phys or 128 * _MIB
        return dict(tile_rows=1024, tile_ff=1024,
                    vmem_limit_bytes=max(32 * _MIB, min(phys, 128 * _MIB) - 16 * _MIB),
                    min_row_tiles=1)
    if "v5" in kind or "v4" in kind:
        # v5e: crossover only ~240 FLOPs/byte; 128 MiB physical VMEM, so use it.
        phys = phys or 128 * _MIB
        return dict(tile_rows=512, tile_ff=1024,
                    vmem_limit_bytes=max(32 * _MIB, min(phys, 128 * _MIB) - 16 * _MIB),
                    min_row_tiles=1)
    # Unknown generation: conservative.
    phys = phys or 64 * _MIB
    return dict(tile_rows=512, tile_ff=512,
                vmem_limit_bytes=max(16 * _MIB, min(phys, 64 * _MIB) - 10 * _MIB),
                min_row_tiles=1)


def _fit_tiles_to_vmem(tm, tf, d_model_p, act_bytes, w_bytes, out_bytes, budget_bytes):
    """Shrink tile_ff first (scales weight slabs), tile_rows last (sets
    arithmetic intensity), until the conservative tile footprint fits."""
    budget = int(budget_bytes * 0.9)

    def footprint(tm_, tf_):
        x_b = 2 * tm_ * d_model_p * act_bytes        # x tile (double-buffered)
        o_b = 2 * tm_ * d_model_p * out_bytes        # output tile
        w1_b = 2 * d_model_p * tf_ * w_bytes         # w1 slab
        w2_b = 2 * tf_ * d_model_p * w_bytes         # w2 slab
        bias_b = 2 * (tf_ + d_model_p) * 4           # biases (f32)
        acc_b = tm_ * d_model_p * 4                  # f32 accumulator scratch
        h_b = tm_ * tf_ * 4                          # f32 GELU temp
        return x_b + o_b + w1_b + w2_b + bias_b + acc_b + h_b

    while footprint(tm, tf) > budget and tf > 128:
        tf = max(128, _round_up(tf // 2, 128))
    while footprint(tm, tf) > budget and tm > 8:
        tm = max(8, _round_up(tm // 2, 8))
    return tm, tf


def _ffn_kernel(x_ref, w1_ref, b1_ref, w2_ref, b2_ref, o_ref, acc_ref, *,
                approximate_gelu):
    # x_ref : (TM, d_model_p)   w1_ref: (d_model_p, TF)   b1_ref: (1, TF)
    # w2_ref: (TF, d_model_p)   b2_ref: (1, d_model_p)
    # o_ref : (TM, d_model_p)   acc_ref: (TM, d_model_p) float32 scratch
    j = pl.program_id(1)
    nj = pl.num_programs(1)

    x = x_ref[...]
    # linear1 slice (MXU, f32 accumulation) + bias + GELU in f32.
    h = jnp.dot(x, w1_ref[...], preferred_element_type=jnp.float32) + b1_ref[...]
    if approximate_gelu:
        # tanh GELU runs on the EUP slot (overlaps the MXU for free) but changes
        # numerics vs PyTorch's exact GELU -> gated behind a flag.
        h = jax.nn.gelu(h, approximate=True)
    else:
        h = _gelu_exact(h)
    # TODO(synk): dropout omitted — module is run in eval/inference mode (identity);
    # a training path would need pltpu.prng_seed + pltpu.prng_random_bits masking.

    # Partial linear2 contribution from this d_ff slice, accumulated in f32.
    p = jnp.dot(h.astype(w2_ref.dtype), w2_ref[...],
                preferred_element_type=jnp.float32)

    @pl.when(j == 0)
    def _():
        acc_ref[...] = p            # first slice: plain store (no zero init/read-back)

    @pl.when(j > 0)
    def _():
        acc_ref[...] += p

    @pl.when(j == nj - 1)
    def _():
        o_ref[...] = (acc_ref[...] + b2_ref[...]).astype(o_ref.dtype)


@functools.partial(
    jax.jit,
    static_argnames=("tile_rows", "tile_ff", "vmem_limit_bytes", "min_row_tiles",
                     "cast_to_bf16", "approximate_gelu"))
def _feed_forward_impl(x, w1, b1, w2, b2, *, tile_rows, tile_ff, vmem_limit_bytes,
                       min_row_tiles, cast_to_bf16, approximate_gelu):
    B, S, d_model = x.shape
    d_ff = w1.shape[1]
    rows = B * S
    out_dtype = x.dtype

    # bf16 operand path: unlocks the bf16 MXU and halves weight HBM traffic.
    # Accumulation stays f32 inside the kernel (preferred_element_type).
    if cast_to_bf16 and x.dtype == jnp.float32:
        x = x.astype(jnp.bfloat16)
        w1 = w1.astype(jnp.bfloat16)
        w2 = w2.astype(jnp.bfloat16)
    b1 = b1.astype(jnp.float32)
    b2 = b2.astype(jnp.float32)

    act_bytes = jnp.dtype(x.dtype).itemsize
    w_bytes = jnp.dtype(w1.dtype).itemsize
    out_bytes = jnp.dtype(out_dtype).itemsize

    # d_model padded to a multiple of 128: lane-dense output stores + full MXU columns.
    d_model_p = _round_up(d_model, 128)

    # Row tile: as large as the per-generation roofline wants, but no larger
    # than the row count, and (on multi-TC chips) capped so >= min_row_tiles
    # row tiles exist for megacore sharding of the "parallel" axis.
    tm = min(tile_rows, _round_up(rows, 8))
    if min_row_tiles > 1:
        tm = min(tm, max(8, _round_up(pl.cdiv(rows, min_row_tiles), 8)))
    # d_ff tile: bounds the weight slabs + (TM, TF) intermediate in VMEM.
    tf = min(tile_ff, _round_up(d_ff, 128))
    tm, tf = _fit_tiles_to_vmem(tm, tf, d_model_p, act_bytes, w_bytes, out_bytes,
                                vmem_limit_bytes)

    rows_p = _round_up(rows, tm)
    d_ff_p = _round_up(d_ff, tf)

    # Zero-padding is exact: padded x columns hit zero w1 rows; padded d_ff
    # columns give GELU(0)=0 against zero w2 rows; padded d_model output
    # columns come from zero w2 columns + zero b2 and are sliced off.
    x2d = x.reshape(rows, d_model)
    pad_r, pad_dm, pad_ff = rows_p - rows, d_model_p - d_model, d_ff_p - d_ff
    if pad_r or pad_dm:
        x2d = jnp.pad(x2d, ((0, pad_r), (0, pad_dm)))
    if pad_dm or pad_ff:
        w1 = jnp.pad(w1, ((0, pad_dm), (0, pad_ff)))
        w2 = jnp.pad(w2, ((0, pad_ff), (0, pad_dm)))
    if pad_ff:
        b1 = jnp.pad(b1, ((0, pad_ff),))
    if pad_dm:
        b2 = jnp.pad(b2, ((0, pad_dm),))
    b1_2d = b1.reshape(1, d_ff_p)
    b2_2d = b2.reshape(1, d_model_p)

    grid = (rows_p // tm, d_ff_p // tf)

    cost = pl.CostEstimate(
        flops=4 * rows_p * d_model_p * d_ff_p,
        transcendentals=rows_p * d_ff_p,
        bytes_accessed=(rows_p * d_model_p * act_bytes
                        + rows_p * d_model_p * out_bytes
                        + grid[0] * (2 * d_model_p * d_ff_p * w_bytes
                                     + (d_ff_p + d_model_p) * 4)),
    )

    kernel = functools.partial(_ffn_kernel, approximate_gelu=approximate_gelu)

    out2d = pl.pallas_call(
        kernel,
        out_shape=jax.ShapeDtypeStruct((rows_p, d_model_p), out_dtype),
        grid_spec=pltpu.PrefetchScalarGridSpec(
            num_scalar_prefetch=0,
            grid=grid,
            in_specs=[
                pl.BlockSpec((tm, d_model_p), lambda i, j: (i, 0)),   # x row tile
                pl.BlockSpec((d_model_p, tf), lambda i, j: (0, j)),   # w1 d_ff slice
                pl.BlockSpec((1, tf), lambda i, j: (0, j)),           # b1 d_ff slice
                pl.BlockSpec((tf, d_model_p), lambda i, j: (j, 0)),   # w2 d_ff slice
                pl.BlockSpec((1, d_model_p), lambda i, j: (0, 0)),    # b2
            ],
            out_specs=pl.BlockSpec((tm, d_model_p), lambda i, j: (i, 0)),
            scratch_shapes=[pltpu.VMEM((tm, d_model_p), jnp.float32)],
        ),
        compiler_params=pltpu.CompilerParams(
            dimension_semantics=("parallel", "arbitrary"),
            vmem_limit_bytes=int(vmem_limit_bytes),
        ),
        cost_estimate=cost,
    )(x2d, w1, b1_2d, w2, b2_2d)

    return out2d[:rows, :d_model].reshape(B, S, d_model)


def feed_forward(x, w1, b1, w2, b2, *, tile_rows=None, tile_ff=None,
                 vmem_limit_bytes=None, cast_to_bf16=True, approximate_gelu=False):
    """x: [B, S, d_model]; w1: [d_model, d_ff]; w2: [d_ff, d_model] (pre-transposed)."""
    cfg = _tpu_defaults()
    return _feed_forward_impl(
        x, w1, b1, w2, b2,
        tile_rows=int(tile_rows if tile_rows else cfg["tile_rows"]),
        tile_ff=int(tile_ff if tile_ff else cfg["tile_ff"]),
        vmem_limit_bytes=int(vmem_limit_bytes if vmem_limit_bytes
                             else cfg["vmem_limit_bytes"]),
        min_row_tiles=int(cfg["min_row_tiles"]),
        cast_to_bf16=bool(cast_to_bf16),
        approximate_gelu=bool(approximate_gelu),
    )


def _reference(x, w1, b1, w2, b2, compute_dtype=None):
    """Pure-JAX reference mirroring the kernel's precision policy."""
    if compute_dtype is not None:
        x = x.astype(compute_dtype)
        w1 = w1.astype(compute_dtype)
        w2 = w2.astype(compute_dtype)
    h = jnp.dot(x, w1, preferred_element_type=jnp.float32) + b1.astype(jnp.float32)
    h = 0.5 * h * (1.0 + jax.lax.erf(h * _SQRT_HALF))
    if compute_dtype is not None:
        h = h.astype(compute_dtype)
    return jnp.dot(h, w2, preferred_element_type=jnp.float32) + b2.astype(jnp.float32)


if __name__ == "__main__":
    key = jax.random.PRNGKey(0)

    # --- Test 1: module-sized shapes; default (bf16 compute) and f32 paths ----
    batch, seq, d_model, d_ff = 2, 8, 32, 64
    kx, kw1, kb1, kw2, kb2, k2 = jax.random.split(key, 6)
    x = jax.random.normal(kx, (batch, seq, d_model), dtype=jnp.float32)
    w1 = jax.random.normal(kw1, (d_model, d_ff), dtype=jnp.float32) / jnp.sqrt(d_model)
    b1 = jax.random.normal(kb1, (d_ff,), dtype=jnp.float32) * 0.01
    w2 = jax.random.normal(kw2, (d_ff, d_model), dtype=jnp.float32) / jnp.sqrt(d_ff)
    b2 = jax.random.normal(kb2, (d_model,), dtype=jnp.float32) * 0.01

    out_bf16 = jax.block_until_ready(feed_forward(x, w1, b1, w2, b2))
    ref_bf16 = _reference(x, w1, b1, w2, b2, compute_dtype=jnp.bfloat16)
    assert out_bf16.shape == (batch, seq, d_model)
    assert out_bf16.dtype == x.dtype
    assert jnp.allclose(out_bf16, ref_bf16, atol=1e-2, rtol=1e-2), "bf16 path mismatch"

    out_f32 = jax.block_until_ready(feed_forward(x, w1, b1, w2, b2, cast_to_bf16=False))
    ref_f32 = _reference(x, w1, b1, w2, b2)
    assert jnp.allclose(out_f32, ref_f32, atol=1e-5, rtol=1e-5), "f32 path mismatch"

    # --- Test 2: non-128 d_model + multi-tile reduction grid (exercises padding
    # and the j>0 accumulation path) --------------------------------------------
    B2, S2, dm2, df2 = 2, 16, 48, 320
    ks = jax.random.split(k2, 5)
    x2 = jax.random.normal(ks[0], (B2, S2, dm2), dtype=jnp.float32)
    w1b = jax.random.normal(ks[1], (dm2, df2), dtype=jnp.float32) / jnp.sqrt(dm2)
    b1b = jax.random.normal(ks[2], (df2,), dtype=jnp.float32) * 0.01
    w2b = jax.random.normal(ks[3], (df2, dm2), dtype=jnp.float32) / jnp.sqrt(df2)
    b2b = jax.random.normal(ks[4], (dm2,), dtype=jnp.float32) * 0.01

    out2 = jax.block_until_ready(
        feed_forward(x2, w1b, b1b, w2b, b2b, tile_rows=16, tile_ff=128,
                     cast_to_bf16=False))
    ref2 = _reference(x2, w1b, b1b, w2b, b2b)
    assert out2.shape == (B2, S2, dm2)
    assert jnp.allclose(out2, ref2, atol=1e-5, rtol=1e-5), "multi-tile mismatch"

    print("KERNEL_OK")
</pallas_src>

<mosaic_0001>
module attributes {stable_mosaic.version = 11 : i64} {
  func.func @_ffn_kernel(%arg0: i32, %arg1: i32, %arg2: memref<16x128xbf16, #tpu.memory_space<vmem>>, %arg3: memref<128x128xbf16, #tpu.memory_space<vmem>>, %arg4: memref<1x128xf32, #tpu.memory_space<vmem>>, %arg5: memref<128x128xbf16, #tpu.memory_space<vmem>>, %arg6: memref<1x128xf32, #tpu.memory_space<vmem>>, %arg7: memref<16x128xf32, #tpu.memory_space<vmem>>, %arg8: memref<16x128xf32, #tpu.memory_space<vmem>>) attributes {dimension_semantics = [#tpu.dimension_semantics<parallel>, #tpu.dimension_semantics<arbitrary>], iteration_bounds = array<i64: 1, 1>, scalar_prefetch = 0 : i64, scratch_operands = 1 : i64, tpu.core_type = #tpu.core_type<tc>, window_params = [{transform_indices = @transform_0, window_bounds = array<i64: 16, 128>}, {transform_indices = @transform_1, window_bounds = array<i64: 128, 128>}, {transform_indices = @transform_2, window_bounds = array<i64: 1, 128>}, {transform_indices = @transform_3, window_bounds = array<i64: 128, 128>}, {pipeline_mode = #tpu.pipeline_mode<synchronous>, transform_indices = @transform_4, window_bounds = array<i64: 1, 128>}, {transform_indices = @transform_5, window_bounds = array<i64: 16, 128>}]} {
    %c0 = arith.constant 0 : index
    %c0_0 = arith.constant 0 : index
    %0 = vector.load %arg2[%c0, %c0_0] : memref<16x128xbf16, #tpu.memory_space<vmem>>, vector<16x128xbf16>
    %c0_1 = arith.constant 0 : index
    %c0_2 = arith.constant 0 : index
    %1 = vector.load %arg3[%c0_1, %c0_2] : memref<128x128xbf16, #tpu.memory_space<vmem>>, vector<128x128xbf16>
    %cst = arith.constant dense<0.000000e+00> : vector<16x128xf32>
    %2 = tpu.matmul %0, %1, %cst {dimension_numbers = #tpu.dot_dimension_numbers<[1], [0], [0], [1], [0, 0, 1, 1], [], []>} : vector<16x128xbf16>, vector<128x128xbf16>, vector<16x128xf32> -> vector<16x128xf32>
    %c0_3 = arith.constant 0 : index
    %c0_4 = arith.constant 0 : index
    %3 = vector.load %arg4[%c0_3, %c0_4] : memref<1x128xf32, #tpu.memory_space<vmem>>, vector<1x128xf32>
    %4 = vector.broadcast %3 : vector<1x128xf32> to vector<16x128xf32>
    %5 = arith.addf %2, %4 : vector<16x128xf32>
    %cst_5 = arith.constant 5.000000e-01 : f32
    %6 = vector.broadcast %cst_5 : f32 to vector<16x128xf32>
    %7 = arith.mulf %6, %5 : vector<16x128xf32>
    %cst_6 = arith.constant 0.707106769 : f32
    %8 = vector.broadcast %cst_6 : f32 to vector<16x128xf32>
    %9 = arith.mulf %5, %8 : vector<16x128xf32>
    %10 = math.erf %9 : vector<16x128xf32>
    %cst_7 = arith.constant 1.000000e+00 : f32
    %11 = vector.broadcast %cst_7 : f32 to vector<16x128xf32>
    %12 = arith.addf %11, %10 : vector<16x128xf32>
    %13 = arith.mulf %7, %12 : vector<16x128xf32>
    %14 = arith.truncf %13 : vector<16x128xf32> to vector<16x128xbf16>
    %c0_8 = arith.constant 0 : index
    %c0_9 = arith.constant 0 : index
    %15 = vector.load %arg5[%c0_8, %c0_9] : memref<128x128xbf16, #tpu.memory_space<vmem>>, vector<128x128xbf16>
    %cst_10 = arith.constant dense<0.000000e+00> : vector<16x128xf32>
    %16 = tpu.matmul %14, %15, %cst_10 {dimension_numbers = #tpu.dot_dimension_numbers<[1], [0], [0], [1], [0, 0, 1, 1], [], []>} : vector<16x128xbf16>, vector<128x128xbf16>, vector<16x128xf32> -> vector<16x128xf32>
    %c0_i32 = arith.constant 0 : i32
    %17 = arith.cmpi eq, %arg1, %c0_i32 : i32
    %18 = arith.extui %17 : i1 to i32
    %c0_i32_11 = arith.constant 0 : i32
    %19 = arith.cmpi ne, %18, %c0_i32_11 : i32
    scf.if %19 {
      %c0_16 = arith.constant 0 : index
      %c0_17 = arith.constant 0 : index
      %26 = vector.load %arg8[%c0_16, %c0_17] : memref<16x128xf32, #tpu.memory_space<vmem>>, vector<16x128xf32>
      tpu.vector_store %arg8[%c0_16, %c0_17], %16 {strides = array<i32>} : memref<16x128xf32, #tpu.memory_space<vmem>>, vector<16x128xf32>,
    } else {
    }
    %c0_i32_12 = arith.constant 0 : i32
    %20 = arith.cmpi sgt, %arg1, %c0_i32_12 : i32
    %21 = arith.extui %20 : i1 to i32
    %c0_i32_13 = arith.constant 0 : i32
    %22 = arith.cmpi ne, %21, %c0_i32_13 : i32
    scf.if %22 {
      %c0_16 = arith.constant 0 : index
      %c0_17 = arith.constant 0 : index
      %26 = vector.load %arg8[%c0_16, %c0_17] : memref<16x128xf32, #tpu.memory_space<vmem>>, vector<16x128xf32>
      %27 = arith.addf %26, %16 : vector<16x128xf32>
      %c0_18 = arith.constant 0 : index
      %c0_19 = arith.constant 0 : index
      %28 = vector.load %arg8[%c0_18, %c0_19] : memref<16x128xf32, #tpu.memory_space<vmem>>, vector<16x128xf32>
      tpu.vector_store %arg8[%c0_18, %c0_19], %27 {strides = array<i32>} : memref<16x128xf32, #tpu.memory_space<vmem>>, vector<16x128xf32>,
    } else {
    }
    %c0_i32_14 = arith.constant 0 : i32
    %23 = arith.cmpi eq, %arg1, %c0_i32_14 : i32
    %24 = arith.extui %23 : i1 to i32
    %c0_i32_15 = arith.constant 0 : i32
    %25 = arith.cmpi ne, %24, %c0_i32_15 : i32
    scf.if %25 {
      %c0_16 = arith.constant 0 : index
      %c0_17 = arith.constant 0 : index
      %26 = vector.load %arg8[%c0_16, %c0_17] : memref<16x128xf32, #tpu.memory_space<vmem>>, vector<16x128xf32>
      %c0_18 = arith.constant 0 : index
      %c0_19 = arith.constant 0 : index
      %27 = vector.load %arg6[%c0_18, %c0_19] : memref<1x128xf32, #tpu.memory_space<vmem>>, vector<1x128xf32>
      %28 = vector.broadcast %27 : vector<1x128xf32> to vector<16x128xf32>
      %29 = arith.addf %26, %28 : vector<16x128xf32>
      %c0_20 = arith.constant 0 : index
      %c0_21 = arith.constant 0 : index
      %30 = vector.load %arg7[%c0_20, %c0_21] : memref<16x128xf32, #tpu.memory_space<vmem>>, vector<16x128xf32>
      tpu.vector_store %arg7[%c0_20, %c0_21], %29 {strides = array<i32>} : memref<16x128xf32, #tpu.memory_space<vmem>>, vector<16x128xf32>,
    } else {
    }
    return
  }
  func.func @transform_0(%arg0: i32, %arg1: i32) -> (i32, i32) {
    %c0_i32 = arith.constant 0 : i32
    %c0_i32_0 = arith.constant 0 : i32
    return %arg0, %c0_i32 : i32, i32
  }
  func.func @transform_1(%arg0: i32, %arg1: i32) -> (i32, i32) {
    %c0_i32 = arith.constant 0 : i32
    %c0_i32_0 = arith.constant 0 : i32
    return %c0_i32, %arg1 : i32, i32
  }
  func.func @transform_2(%arg0: i32, %arg1: i32) -> (i32, i32) {
    %c0_i32 = arith.constant 0 : i32
    %c0_i32_0 = arith.constant 0 : i32
    return %c0_i32, %arg1 : i32, i32
  }
  func.func @transform_3(%arg0: i32, %arg1: i32) -> (i32, i32) {
    %c0_i32 = arith.constant 0 : i32
    %c0_i32_0 = arith.constant 0 : i32
    return %arg1, %c0_i32 : i32, i32
  }
  func.func @transform_4(%arg0: i32, %arg1: i32) -> (i32, i32) {
    %c0_i32 = arith.constant 0 : i32
    %c0_i32_0 = arith.constant 0 : i32
    %c0_i32_1 = arith.constant 0 : i32
    return %c0_i32, %c0_i32_0 : i32, i32
  }
  func.func @transform_5(%arg0: i32, %arg1: i32) -> (i32, i32) {
    %c0_i32 = arith.constant 0 : i32
    %c0_i32_0 = arith.constant 0 : i32
    return %arg0, %c0_i32 : i32, i32
  }
}

</mosaic_0001>

<llo_original>
// kernel: _feed_forward_impl.1
$region0: #{_feed_forward_impl.1}
  #allocation0 [shape = 'u32[]', space=smem, size = 0x4, offset = 0x4, fixed_abs, tag = 'smem constant byte address 0x4 - core index']
  #allocation1 [shape = 'u32[144,128]{1,0:T(1,128)}', space=vmem, size = 0x12000, scoped, tag = 'internal scratch']
  #allocation2 [shape = 'f32[16,128]{1,0:T(8,128)}', space=vmem, size = 0x2000, scoped, tag = 'scratch operand']
  %s0 = inlined_call_operand.vmem [shape: bf16[16,128], index: 0, kind: input, shape index: {}]
  %s1 = inlined_call_operand.vmem [shape: bf16[128,128], index: 1, kind: input, shape index: {}]
  %s2 = inlined_call_operand.vmem [shape: f32[1,128], index: 2, kind: input, shape index: {}]
  %s3 = inlined_call_operand.vmem [shape: bf16[128,128], index: 3, kind: input, shape index: {}]
  %s4 = inlined_call_operand.vmem [shape: f32[1,128], index: 4, kind: input, shape index: {}]
  %s5 = inlined_call_operand.vmem [shape: f32[16,128], index: 5, kind: output, shape index: {}]
  %s6 = sld [smem:[#allocation0]]
  $region42: #{_feed_forward_impl.1} parent=0
    _
  %s8 = ssub.s32 1, %s6
  %s9 = scalar_select 0, %s8, %s6
  // Predicated region
  $region2: #{_feed_forward_impl.1} parent=0 // pred_check
    _
  $region3: #{_feed_forward_impl.1} parent=0 // pred_check_branch
    %11 = sbr.rel (0) target = $region5
  $region4: #{_feed_forward_impl.1} parent=0 // pred_region
    _
  $region5: #{_feed_forward_impl.1} parent=0 // pred_fallthru
    _
  // Predicated region
  $region6: #{_feed_forward_impl.1} parent=0 // pred_check
    _
  $region7: #{_feed_forward_impl.1} parent=0 // pred_check_branch
    %13 = sbr.rel (0) target = $region9
  $region8: #{_feed_forward_impl.1} parent=0 // pred_region
    _
  $region9: #{_feed_forward_impl.1} parent=0 // pred_fallthru
    _
  // Predicated region
  $region10: #{_feed_forward_impl.1} parent=0 // pred_check
    _
  $region11: #{_feed_forward_impl.1} parent=0 // pred_check_branch
    %15 = sbr.rel (0) target = $region13
  $region12: #{_feed_forward_impl.1} parent=0 // pred_region
    _
  $region13: #{_feed_forward_impl.1} parent=0 // pred_fallthru
    _
  // Predicated region
  $region14: #{_feed_forward_impl.1} parent=0 // pred_check
    _
  $region15: #{_feed_forward_impl.1} parent=0 // pred_check_branch
    %17 = sbr.rel (0) target = $region17
  $region16: #{_feed_forward_impl.1} parent=0 // pred_region
    _
  $region17: #{_feed_forward_impl.1} parent=0 // pred_fallthru
    _
  // Predicated region
  $region18: #{_feed_forward_impl.1} parent=0 // pred_check
    _
  $region19: #{_feed_forward_impl.1} parent=0 // pred_check_branch
    %19 = sbr.rel (0) target = $region21
  $region20: #{_feed_forward_impl.1} parent=0 // pred_region
    _
  $region21: #{_feed_forward_impl.1} parent=0 // pred_fallthru
    _
  %v21 = vld [vmem:[%s0] sm:$0xf]
  %v22 = vld [vmem:[%s0 + $0x4] sm:$0xf]
  %v23 = vld [vmem:[%s1] sm:$0xf]
  %v24 = vld [vmem:[%s1 + $0x4] sm:$0xf]
  %v25 = vld [vmem:[%s1 + $0x8] sm:$0xf]
  %v26 = vld [vmem:[%s1 + $0xc] sm:$0xf]
  %v27 = vld [vmem:[%s1 + $0x10] sm:$0xf]
  %v28 = vld [vmem:[%s1 + $0x14] sm:$0xf]
  %v29 = vld [vmem:[%s1 + $0x18] sm:$0xf]
  %v30 = vld [vmem:[%s1 + $0x1c] sm:$0xf]
  %v31 = vld [vmem:[%s1 + $0x20] sm:$0xf]
  %v32 = vld [vmem:[%s1 + $0x24] sm:$0xf]
  %v33 = vld [vmem:[%s1 + $0x28] sm:$0xf]
  %v34 = vld [vmem:[%s1 + $0x2c] sm:$0xf]
  %v35 = vld [vmem:[%s1 + $0x30] sm:$0xf]
  %v36 = vld [vmem:[%s1 + $0x34] sm:$0xf]
  %v37 = vld [vmem:[%s1 + $0x38] sm:$0xf]
  %v38 = vld [vmem:[%s1 + $0x3c] sm:$0xf]
  %v39 = vld [vmem:[%s2] sm:$0x1]
  %v41 = vlaneseq
  %v42 = vshrl.u32 %v41, 7
  %v43 = vsub.s32 0, %v42
  %v44 = vrot.slane %v39, %v43
  %v48 = vunpack.c.l.b16 %v21
  %v49 = vunpack.c.l.b16 %v22
  %v50 = vpack.c.b16 %v49, %v48
  %v68 = vunpack.c.l.b16 %v23
  %v69 = vunpack.c.l.b16 %v24
  %v70 = vunpack.c.l.b16 %v25
  %v71 = vunpack.c.l.b16 %v26
  %v72 = vunpack.c.l.b16 %v27
  %v73 = vunpack.c.l.b16 %v28
  %v74 = vunpack.c.l.b16 %v29
  %v75 = vunpack.c.l.b16 %v30
  %v76 = vunpack.c.l.b16 %v31
  %v77 = vunpack.c.l.b16 %v32
  %v78 = vunpack.c.l.b16 %v33
  %v79 = vunpack.c.l.b16 %v34
  %v80 = vunpack.c.l.b16 %v35
  %v81 = vunpack.c.l.b16 %v36
  %v82 = vunpack.c.l.b16 %v37
  %v83 = vunpack.c.l.b16 %v38
  %v84 = vpack.c.b16 %v69, %v68
  %v85 = vpack.c.b16 %v71, %v70
  %v86 = vpack.c.b16 %v73, %v72
  %v87 = vpack.c.b16 %v75, %v74
  %v88 = vpack.c.b16 %v77, %v76
  %v89 = vpack.c.b16 %v79, %v78
  %v90 = vpack.c.b16 %v81, %v80
  %v91 = vpack.c.b16 %v83, %v82
  %100 = vmatprep.subr.bf16.mxu0 0
  %101 = vmatpush1.bf16.msra.mxu0 %v84
  %102 = vmatprep.subr.bf16.mxu0 0
  %103 = vmatpush1.bf16.msra.mxu0 %v85
  %104 = vmatprep.subr.bf16.mxu0 0
  %105 = vmatpush1.bf16.msra.mxu0 %v86
  %106 = vmatprep.subr.bf16.mxu0 0
  %107 = vmatpush1.bf16.msra.mxu0 %v87
  %108 = vmatprep.subr.bf16.mxu0 0
  %109 = vmatpush1.bf16.msra.mxu0 %v88
  %110 = vmatprep.subr.bf16.mxu0 0
  %111 = vmatpush1.bf16.msra.mxu0 %v89
  %112 = vmatprep.subr.bf16.mxu0 0
  %113 = vmatpush1.bf16.msra.mxu0 %v90
  %114 = vmatprep.subr.bf16.mxu0 0
  %115 = vmatpush1.bf16.msra.mxu0 %v91
  %116 = vmatprep.subr.bf16.mxu0 0
  %117 = vmatpush1.bf16.msra.mxu0 0
  %118 = vmatprep.subr.bf16.mxu0 0
  %119 = vmatpush1.bf16.msra.mxu0 0
  %120 = vmatprep.subr.bf16.mxu0 0
  %121 = vmatpush1.bf16.msra.mxu0 0
  %122 = vmatprep.subr.bf16.mxu0 0
  %123 = vmatpush1.bf16.msra.mxu0 0
  %124 = vmatprep.subr.bf16.mxu0 0
  %125 = vmatpush1.bf16.msra.mxu0 0
  %126 = vmatprep.subr.bf16.mxu0 0
  %127 = vmatpush1.bf16.msra.mxu0 0
  %128 = vmatprep.subr.bf16.mxu0 0
  %129 = vmatpush1.bf16.msra.mxu0 0
  %130 = vmatprep.subr.bf16.mxu0 0
  %131 = vmatpush1.bf16.msra.mxu0 0
  %132 = vmatprep.mubr.bf16.mxu0 0
  %133 = vmatmul.mubr.bf16.gmra.mrb[0].mxu0 %v50
  %v134 = vpop.f32.mrb[0].mxu0
  %v135 = vadd.f32 %v44, %v134
  %v136 = vpop.f32.mrb[0].mxu0
  %v137 = vpop.f32.mrb[0].mxu0
  %v138 = vadd.f32 %v44, %v137
  %v139 = vpop.f32.mrb[0].mxu0
  %140 = vdwg.mxu0
  %v141 = vmul.f32 %v135, 0.5
  %v142 = vmul.f32 %v138, 0.5
  %v143 = vmul.f32 %v135, 0.70710677
  %v144 = vmul.f32 %v138, 0.70710677
  %v145 = verf.f32.pop %v143
  %v146 = verf.f32.pop %v144
  %v147 = vadd.f32 %v145, 1.0
  %v148 = vadd.f32 %v146, 1.0
  %v149 = vmul.f32 %v141, %v147
  %v150 = vmul.f32 %v142, %v148
  %v151 = vpack.c.bf16 %v150, %v149
  %v152 = vld [vmem:[%s3] sm:$0xf]
  %v153 = vld [vmem:[%s3 + $0x4] sm:$0xf]
  %v154 = vld [vmem:[%s3 + $0x8] sm:$0xf]
  %v155 = vld [vmem:[%s3 + $0xc] sm:$0xf]
  %v156 = vld [vmem:[%s3 + $0x10] sm:$0xf]
  %v157 = vld [vmem:[%s3 + $0x14] sm:$0xf]
  %v158 = vld [vmem:[%s3 + $0x18] sm:$0xf]
  %v159 = vld [vmem:[%s3 + $0x1c] sm:$0xf]
  %v160 = vld [vmem:[%s3 + $0x20] sm:$0xf]
  %v161 = vld [vmem:[%s3 + $0x24] sm:$0xf]
  %v162 = vld [vmem:[%s3 + $0x28] sm:$0xf]
  %v163 = vld [vmem:[%s3 + $0x2c] sm:$0xf]
  %v164 = vld [vmem:[%s3 + $0x30] sm:$0xf]
  %v165 = vld [vmem:[%s3 + $0x34] sm:$0xf]
  %v166 = vld [vmem:[%s3 + $0x38] sm:$0xf]
  %v167 = vld [vmem:[%s3 + $0x3c] sm:$0xf]
  %v184 = vunpack.c.l.b16 %v152
  %v185 = vunpack.c.l.b16 %v153
  %v186 = vunpack.c.l.b16 %v154
  %v187 = vunpack.c.l.b16 %v155
  %v188 = vunpack.c.l.b16 %v156
  %v189 = vunpack.c.l.b16 %v157
  %v190 = vunpack.c.l.b16 %v158
  %v191 = vunpack.c.l.b16 %v159
  %v192 = vunpack.c.l.b16 %v160
  %v193 = vunpack.c.l.b16 %v161
  %v194 = vunpack.c.l.b16 %v162
  %v195 = vunpack.c.l.b16 %v163
  %v196 = vunpack.c.l.b16 %v164
  %v197 = vunpack.c.l.b16 %v165
  %v198 = vunpack.c.l.b16 %v166
  %v199 = vunpack.c.l.b16 %v167
  %v200 = vpack.c.b16 %v185, %v184
  %v201 = vpack.c.b16 %v187, %v186
  %v202 = vpack.c.b16 %v189, %v188
  %v203 = vpack.c.b16 %v191, %v190
  %v204 = vpack.c.b16 %v193, %v192
  %v205 = vpack.c.b16 %v195, %v194
  %v206 = vpack.c.b16 %v197, %v196
  %v207 = vpack.c.b16 %v199, %v198
  %216 = vmatprep.subr.bf16.mxu0 0
  %217 = vmatpush1.bf16.msra.mxu0 %v200
  %218 = vmatprep.subr.bf16.mxu0 0
  %219 = vmatpush1.bf16.msra.mxu0 %v201
  %220 = vmatprep.subr.bf16.mxu0 0
  %221 = vmatpush1.bf16.msra.mxu0 %v202
  %222 = vmatprep.subr.bf16.mxu0 0
  %223 = vmatpush1.bf16.msra.mxu0 %v203
  %224 = vmatprep.subr.bf16.mxu0 0
  %225 = vmatpush1.bf16.msra.mxu0 %v204
  %226 = vmatprep.subr.bf16.mxu0 0
  %227 = vmatpush1.bf16.msra.mxu0 %v205
  %228 = vmatprep.subr.bf16.mxu0 0
  %229 = vmatpush1.bf16.msra.mxu0 %v206
  %230 = vmatprep.subr.bf16.mxu0 0
  %231 = vmatpush1.bf16.msra.mxu0 %v207
  %232 = vmatprep.subr.bf16.mxu0 0
  %233 = vmatpush1.bf16.msra.mxu0 0
  %234 = vmatprep.subr.bf16.mxu0 0
  %235 = vmatpush1.bf16.msra.mxu0 0
  %236 = vmatprep.subr.bf16.mxu0 0
  %237 = vmatpush1.bf16.msra.mxu0 0
  %238 = vmatprep.subr.bf16.mxu0 0
  %239 = vmatpush1.bf16.msra.mxu0 0
  %240 = vmatprep.subr.bf16.mxu0 0
  %241 = vmatpush1.bf16.msra.mxu0 0
  %242 = vmatprep.subr.bf16.mxu0 0
  %243 = vmatpush1.bf16.msra.mxu0 0
  %244 = vmatprep.subr.bf16.mxu0 0
  %245 = vmatpush1.bf16.msra.mxu0 0
  %246 = vmatprep.subr.bf16.mxu0 0
  %247 = vmatpush1.bf16.msra.mxu0 0
  %248 = vmatprep.mubr.bf16.mxu0 0
  %249 = vmatmul.mubr.bf16.gmra.mrb[0].mxu0 %v151
  %v250 = vpop.f32.mrb[0].mxu0
  %v251 = vadd.f32 0.0, %v250
  %v252 = vpop.f32.mrb[0].mxu0
  %v253 = vpop.f32.mrb[0].mxu0
  %v254 = vadd.f32 0.0, %v253
  %v255 = vpop.f32.mrb[0].mxu0
  %256 = vdwg.mxu0
  %p257 = scmp.eq.s32.totalorder 0, 0
  // Predicated region
  $region22: #{_feed_forward_impl.1} parent=0 // pred_check
    %p258 = pneg %p257
  $region23: #{_feed_forward_impl.1} parent=0 // pred_check_branch
    %260 = sbr.rel (%p258) target = $region25
  $region24: #{_feed_forward_impl.1} parent=0 // pred_region
    %261 = vst [vmem:[#allocation2] sm:$0xff] %v251
    %262 = vst [vmem:[#allocation2 + $0x8] sm:$0xff] %v254
  $region25: #{_feed_forward_impl.1} parent=0 // pred_fallthru
    _
  %p263 = scmp.gt.s32.totalorder 0, 0
  // Predicated region
  $region26: #{_feed_forward_impl.1} parent=0 // pred_check
    %p264 = pneg %p263
  $region27: #{_feed_forward_impl.1} parent=0 // pred_check_branch
    %266 = sbr.rel (%p264) target = $region29
  $region28: #{_feed_forward_impl.1} parent=0 // pred_region
    %v267 = vld [vmem:[#allocation2] sm:$0xff]
    %v268 = vld [vmem:[#allocation2 + $0x8] sm:$0xff]
    %v269 = vadd.f32 %v267, %v251
    %v270 = vadd.f32 %v268, %v254
    %271 = vst [vmem:[#allocation2] sm:$0xff] %v269
    %272 = vst [vmem:[#allocation2 + $0x8] sm:$0xff] %v270
  $region29: #{_feed_forward_impl.1} parent=0 // pred_fallthru
    _
  // Predicated region
  $region30: #{_feed_forward_impl.1} parent=0 // pred_check
    %p273 = pneg %p257
  $region31: #{_feed_forward_impl.1} parent=0 // pred_check_branch
    %275 = sbr.rel (%p273) target = $region33
  $region32: #{_feed_forward_impl.1} parent=0 // pred_region
    %v276 = vld [vmem:[#allocation2] sm:$0xff]
    %v277 = vld [vmem:[#allocation2 + $0x8] sm:$0xff]
    %v278 = vld [vmem:[%s4] sm:$0x1]
    %v280 = vlaneseq
    %v281 = vshrl.u32 %v280, 7
    %v282 = vsub.s32 0, %v281
    %v283 = vrot.slane %v278, %v282
    %v285 = vadd.f32 %v276, %v283
    %v286 = vadd.f32 %v277, %v283
    %287 = vst [vmem:[%s5] sm:$0xff] %v285
    %288 = vst [vmem:[%s5 + $0x8] sm:$0xff] %v286
  $region33: #{_feed_forward_impl.1} parent=0 // pred_fallthru
    _
  // Predicated region
  $region34: #{_feed_forward_impl.1} parent=0 // pred_check
    _
  $region35: #{_feed_forward_impl.1} parent=0 // pred_check_branch
    %290 = sbr.rel (0) target = $region37
  $region36: #{_feed_forward_impl.1} parent=0 // pred_region
    _
  $region37: #{_feed_forward_impl.1} parent=0 // pred_fallthru
    _
  // Predicated region
  $region38: #{_feed_forward_impl.1} parent=0 // pred_check
    _
  $region39: #{_feed_forward_impl.1} parent=0 // pred_check_branch
    %292 = sbr.rel (0) target = $region41
  $region40: #{_feed_forward_impl.1} parent=0 // pred_region
    _
  $region41: #{_feed_forward_impl.1} parent=0 // pred_fallthru
    _

</llo_original>
